<compile_context>
chip_gen: v6e
topology: v6e:2x2x1
jax: 0.10.0
libtpu: 0.0.40
codegen_flags: <defaults>
</compile_context>

<pallas_src>
import jax
import jax.numpy as jnp
import numpy as np
from jax.experimental import pallas as pl
from jax.experimental.pallas import tpu as pltpu


def _pick_channel_tile(D, H, W, P0, G0, itemsize,
                       *, budget_bytes=8 << 20, max_unroll=8):
    """Largest divisor TD of D s.t. double-buffered blocks fit the VMEM budget
    and the in-kernel unroll (TD * G0 band copies) stays small."""
    lane_pad = lambda n: ((n + 127) // 128) * 128
    sub_pad = lambda n: ((n + 7) // 8) * 8
    Wp = lane_pad(W)
    Hp = sub_pad(H)
    P0p = sub_pad(P0)
    best = 1
    for td in range(1, D + 1):
        if D % td or td > max_unroll:
            continue
        in_bytes = td * Hp * Wp * itemsize                 # input block
        out_bytes = 2 * G0 * td * P0p * Wp * itemsize      # stacked output block
        if 2 * (in_bytes + out_bytes) <= budget_bytes:     # x2 double buffering
            best = td
    return best


def make_sw_tensorize(B, C, H, W, *, num_heads, patch_size, dtype=jnp.float32):
    NH = num_heads
    assert C % NH == 0, "channels must be divisible by num_heads"
    D = C // NH
    P0, P1 = patch_size
    assert H % P0 == 0 and W % P1 == 0, "spatial dims must be divisible by patch"
    G0, G1 = H // P0, W // P1
    # SWTensorize default shifts = [None, (p0//2, p1//2)]
    S0, S1 = P0 // 2, P1 // 2

    itemsize = jnp.dtype(dtype).itemsize
    TD = _pick_channel_tile(D, H, W, P0, G0, itemsize)
    DT = D // TD

    def kernel(x_ref, o_ref):
        # x_ref: (1, 1, TD, H, W)            one (batch, head) channel tile
        # o_ref: (2, 1, 1, G0, TD, P0, W)    [variant, ., ., g0, d, p0, w]
        for td in range(TD):
            xi = x_ref[0, 0, td]                           # (H, W), lane-dense
            # torch.roll along W (out[w] = in[(w - S1) % W]); single XLU roll.
            xw = pltpu.roll(xi, S1, axis=1) if S1 else xi
            for g0 in range(G0):
                r0 = g0 * P0
                # variant 0: unshifted window band, full-width (P0, W) copy
                o_ref[0, 0, 0, g0, td] = xi[r0:r0 + P0, :]
                # variant 1: H-roll folded into static band offsets
                if S0 == 0:
                    o_ref[1, 0, 0, g0, td] = xw[r0:r0 + P0, :]
                elif g0 == 0:
                    # wrapped band: rows [H-S0:H] then [0:P0-S0]
                    o_ref[1, 0, 0, 0, td, 0:S0, :] = xw[H - S0:H, :]
                    o_ref[1, 0, 0, 0, td, S0:P0, :] = xw[0:P0 - S0, :]
                else:
                    o_ref[1, 0, 0, g0, td] = xw[r0 - S0:r0 + P0 - S0, :]

    grid_spec = pltpu.PrefetchScalarGridSpec(
        num_scalar_prefetch=0,
        grid=(B, NH, DT),
        in_specs=[pl.BlockSpec((1, 1, TD, H, W),
                               lambda b, h, dt: (b, h, dt, 0, 0))],
        out_specs=pl.BlockSpec((2, 1, 1, G0, TD, P0, W),
                               lambda b, h, dt: (0, b, h, 0, dt, 0, 0)),
    )

    call = pl.pallas_call(
        kernel,
        out_shape=jax.ShapeDtypeStruct((2, B, NH, G0, D, P0, W), dtype),
        grid_spec=grid_spec,
        compiler_params=pltpu.CompilerParams(
            dimension_semantics=("parallel", "parallel", "parallel"),
            vmem_limit_bytes=32 * 1024 * 1024),
        cost_estimate=pl.CostEstimate(
            flops=0, transcendentals=0,
            bytes_accessed=3 * B * C * H * W * itemsize),
    )

    def fwd(x):
        x5 = x.reshape(B, NH, D, H, W)                 # free metadata reshape
        o = call(x5)                                   # (2, B, NH, G0, D, P0, W)
        # (g1, p1) regroup: reshape + transpose in XLA (lane-dense on both ends),
        # then collapse (variant, b, h) -> concat order of torch.cat(dim=0).
        o = o.reshape(2, B, NH, G0, D, P0, G1, P1)
        o = jnp.transpose(o, (0, 1, 2, 3, 6, 4, 5, 7))  # -> (2,B,NH,G0,G1,D,P0,P1)
        return o.reshape(2 * B * NH, G0 * G1, D, P0, P1)

    return jax.jit(fwd)


def sw_tensorize_reference(x, *, num_heads, patch_size):
    """Pure-JAX reference matching PyTorch SWTensorize.forward."""
    B, C, H, W = x.shape
    NH = num_heads
    D = C // NH
    P0, P1 = patch_size
    G0, G1 = H // P0, W // P1

    def tensorize(xx):
        # 'b (h d) (g0 p0) (g1 p1) -> (b h) (g0 g1) d p0 p1'
        y = xx.reshape(B, NH, D, G0, P0, G1, P1)
        y = jnp.transpose(y, (0, 1, 3, 5, 2, 4, 6))
        return y.reshape(B * NH, G0 * G1, D, P0, P1)

    x_shift = jnp.roll(x, shift=(P0 // 2, P1 // 2), axis=(2, 3))
    return jnp.concatenate([tensorize(x), tensorize(x_shift)], axis=0)


def _run_case(key, B, C, H, W, num_heads, patch_size):
    x = jax.random.normal(key, (B, C, H, W), dtype=jnp.float32)
    fwd = make_sw_tensorize(B, C, H, W, num_heads=num_heads,
                            patch_size=patch_size, dtype=jnp.float32)
    out = jax.block_until_ready(fwd(x))
    ref = jax.block_until_ready(
        sw_tensorize_reference(x, num_heads=num_heads, patch_size=patch_size))
    assert out.shape == ref.shape, (out.shape, ref.shape)
    # Pure data movement -> exact equality.
    np.testing.assert_allclose(np.asarray(out), np.asarray(ref), rtol=0, atol=0)


if __name__ == "__main__":
    key = jax.random.PRNGKey(0)
    k1, k2 = jax.random.split(key)

    # Main config: NCHW input, 2 heads, 8x8 patches (shift = 4,4).
    _run_case(k1, B=2, C=8, H=16, W=16, num_heads=2, patch_size=(8, 8))
    # Second config: 1 head, 4x4 patches (shift = 2,2), more grid cells.
    _run_case(k2, B=1, C=4, H=16, W=16, num_heads=1, patch_size=(4, 4))

    print("KERNEL_OK")
</pallas_src>

<mosaic_0001>
module attributes {stable_mosaic.version = 11 : i64} {
  func.func @kernel(%arg0: i32, %arg1: i32, %arg2: i32, %arg3: memref<1x1x4x16x16xf32, #tpu.memory_space<vmem>>, %arg4: memref<2x1x1x2x4x8x16xf32, #tpu.memory_space<vmem>>) attributes {dimension_semantics = [#tpu.dimension_semantics<parallel>, #tpu.dimension_semantics<parallel>, #tpu.dimension_semantics<parallel>], iteration_bounds = array<i64: 2, 2, 1>, scalar_prefetch = 0 : i64, scratch_operands = 0 : i64, tpu.core_type = #tpu.core_type<tc>, window_params = [{transform_indices = @transform_0, window_bounds = array<i64: 1, 1, 4, 16, 16>}, {transform_indices = @transform_1, window_bounds = array<i64: 2, 1, 1, 2, 4, 8, 16>}]} {
    %c0 = arith.constant 0 : index
    %c0_0 = arith.constant 0 : index
    %c0_1 = arith.constant 0 : index
    %c0_2 = arith.constant 0 : index
    %c0_3 = arith.constant 0 : index
    %0 = vector.load %arg3[%c0, %c0_0, %c0_1, %c0_2, %c0_3] : memref<1x1x4x16x16xf32, #tpu.memory_space<vmem>>, vector<1x1x1x16x16xf32>
    %1 = vector.shape_cast %0 : vector<1x1x1x16x16xf32> to vector<16x16xf32>
    %c4_i32 = arith.constant 4 : i32
    %2 = tpu.dynamic_rotate %1 by %c4_i32 dim 1 : vector<16x16xf32>, i32 -> vector<16x16xf32>
    %3 = vector.extract_strided_slice %1 {offsets = [0, 0], sizes = [8, 16], strides = [1, 1]} : vector<16x16xf32> to vector<8x16xf32>
    %c0_4 = arith.constant 0 : index
    %c0_5 = arith.constant 0 : index
    %c0_6 = arith.constant 0 : index
    %c0_7 = arith.constant 0 : index
    %c0_8 = arith.constant 0 : index
    %c0_9 = arith.constant 0 : index
    %c0_10 = arith.constant 0 : index
    %4 = vector.load %arg4[%c0_4, %c0_5, %c0_6, %c0_7, %c0_8, %c0_9, %c0_10] : memref<2x1x1x2x4x8x16xf32, #tpu.memory_space<vmem>>, vector<1x1x1x1x1x8x16xf32>
    %5 = vector.shape_cast %4 : vector<1x1x1x1x1x8x16xf32> to vector<8x16xf32>
    %6 = vector.shape_cast %3 : vector<8x16xf32> to vector<1x1x1x1x1x8x16xf32>
    tpu.vector_store %arg4[%c0_4, %c0_5, %c0_6, %c0_7, %c0_8, %c0_9, %c0_10], %6 {strides = array<i32>} : memref<2x1x1x2x4x8x16xf32, #tpu.memory_space<vmem>>, vector<1x1x1x1x1x8x16xf32>,
    %7 = vector.extract_strided_slice %2 {offsets = [12, 0], sizes = [4, 16], strides = [1, 1]} : vector<16x16xf32> to vector<4x16xf32>
    %c1 = arith.constant 1 : index
    %c0_11 = arith.constant 0 : index
    %c0_12 = arith.constant 0 : index
    %c0_13 = arith.constant 0 : index
    %c0_14 = arith.constant 0 : index
    %c0_15 = arith.constant 0 : index
    %c0_16 = arith.constant 0 : index
    %8 = vector.load %arg4[%c1, %c0_11, %c0_12, %c0_13, %c0_14, %c0_15, %c0_16] : memref<2x1x1x2x4x8x16xf32, #tpu.memory_space<vmem>>, vector<1x1x1x1x1x4x16xf32>
    %9 = vector.shape_cast %8 : vector<1x1x1x1x1x4x16xf32> to vector<4x16xf32>
    %10 = vector.shape_cast %7 : vector<4x16xf32> to vector<1x1x1x1x1x4x16xf32>
    tpu.vector_store %arg4[%c1, %c0_11, %c0_12, %c0_13, %c0_14, %c0_15, %c0_16], %10 {strides = array<i32>} : memref<2x1x1x2x4x8x16xf32, #tpu.memory_space<vmem>>, vector<1x1x1x1x1x4x16xf32>,
    %11 = vector.extract_strided_slice %2 {offsets = [0, 0], sizes = [4, 16], strides = [1, 1]} : vector<16x16xf32> to vector<4x16xf32>
    %c1_17 = arith.constant 1 : index
    %c0_18 = arith.constant 0 : index
    %c0_19 = arith.constant 0 : index
    %c0_20 = arith.constant 0 : index
    %c0_21 = arith.constant 0 : index
    %c4 = arith.constant 4 : index
    %c0_22 = arith.constant 0 : index
    %12 = vector.load %arg4[%c1_17, %c0_18, %c0_19, %c0_20, %c0_21, %c4, %c0_22] : memref<2x1x1x2x4x8x16xf32, #tpu.memory_space<vmem>>, vector<1x1x1x1x1x4x16xf32>
    %13 = vector.shape_cast %12 : vector<1x1x1x1x1x4x16xf32> to vector<4x16xf32>
    %14 = vector.shape_cast %11 : vector<4x16xf32> to vector<1x1x1x1x1x4x16xf32>
    tpu.vector_store %arg4[%c1_17, %c0_18, %c0_19, %c0_20, %c0_21, %c4, %c0_22], %14 {strides = array<i32>} : memref<2x1x1x2x4x8x16xf32, #tpu.memory_space<vmem>>, vector<1x1x1x1x1x4x16xf32>,
    %15 = vector.extract_strided_slice %1 {offsets = [8, 0], sizes = [8, 16], strides = [1, 1]} : vector<16x16xf32> to vector<8x16xf32>
    %c0_23 = arith.constant 0 : index
    %c0_24 = arith.constant 0 : index
    %c0_25 = arith.constant 0 : index
    %c1_26 = arith.constant 1 : index
    %c0_27 = arith.constant 0 : index
    %c0_28 = arith.constant 0 : index
    %c0_29 = arith.constant 0 : index
    %16 = vector.load %arg4[%c0_23, %c0_24, %c0_25, %c1_26, %c0_27, %c0_28, %c0_29] : memref<2x1x1x2x4x8x16xf32, #tpu.memory_space<vmem>>, vector<1x1x1x1x1x8x16xf32>
    %17 = vector.shape_cast %16 : vector<1x1x1x1x1x8x16xf32> to vector<8x16xf32>
    %18 = vector.shape_cast %15 : vector<8x16xf32> to vector<1x1x1x1x1x8x16xf32>
    tpu.vector_store %arg4[%c0_23, %c0_24, %c0_25, %c1_26, %c0_27, %c0_28, %c0_29], %18 {strides = array<i32>} : memref<2x1x1x2x4x8x16xf32, #tpu.memory_space<vmem>>, vector<1x1x1x1x1x8x16xf32>,
    %19 = vector.extract_strided_slice %2 {offsets = [4, 0], sizes = [8, 16], strides = [1, 1]} : vector<16x16xf32> to vector<8x16xf32>
    %c1_30 = arith.constant 1 : index
    %c0_31 = arith.constant 0 : index
    %c0_32 = arith.constant 0 : index
    %c1_33 = arith.constant 1 : index
    %c0_34 = arith.constant 0 : index
    %c0_35 = arith.constant 0 : index
    %c0_36 = arith.constant 0 : index
    %20 = vector.load %arg4[%c1_30, %c0_31, %c0_32, %c1_33, %c0_34, %c0_35, %c0_36] : memref<2x1x1x2x4x8x16xf32, #tpu.memory_space<vmem>>, vector<1x1x1x1x1x8x16xf32>
    %21 = vector.shape_cast %20 : vector<1x1x1x1x1x8x16xf32> to vector<8x16xf32>
    %22 = vector.shape_cast %19 : vector<8x16xf32> to vector<1x1x1x1x1x8x16xf32>
    tpu.vector_store %arg4[%c1_30, %c0_31, %c0_32, %c1_33, %c0_34, %c0_35, %c0_36], %22 {strides = array<i32>} : memref<2x1x1x2x4x8x16xf32, #tpu.memory_space<vmem>>, vector<1x1x1x1x1x8x16xf32>,
    %c0_37 = arith.constant 0 : index
    %c0_38 = arith.constant 0 : index
    %c1_39 = arith.constant 1 : index
    %c0_40 = arith.constant 0 : index
    %c0_41 = arith.constant 0 : index
    %23 = vector.load %arg3[%c0_37, %c0_38, %c1_39, %c0_40, %c0_41] : memref<1x1x4x16x16xf32, #tpu.memory_space<vmem>>, vector<1x1x1x16x16xf32>
    %24 = vector.shape_cast %23 : vector<1x1x1x16x16xf32> to vector<16x16xf32>
    %c4_i32_42 = arith.constant 4 : i32
    %25 = tpu.dynamic_rotate %24 by %c4_i32_42 dim 1 : vector<16x16xf32>, i32 -> vector<16x16xf32>
    %26 = vector.extract_strided_slice %24 {offsets = [0, 0], sizes = [8, 16], strides = [1, 1]} : vector<16x16xf32> to vector<8x16xf32>
    %c0_43 = arith.constant 0 : index
    %c0_44 = arith.constant 0 : index
    %c0_45 = arith.constant 0 : index
    %c0_46 = arith.constant 0 : index
    %c1_47 = arith.constant 1 : index
    %c0_48 = arith.constant 0 : index
    %c0_49 = arith.constant 0 : index
    %27 = vector.load %arg4[%c0_43, %c0_44, %c0_45, %c0_46, %c1_47, %c0_48, %c0_49] : memref<2x1x1x2x4x8x16xf32, #tpu.memory_space<vmem>>, vector<1x1x1x1x1x8x16xf32>
    %28 = vector.shape_cast %27 : vector<1x1x1x1x1x8x16xf32> to vector<8x16xf32>
    %29 = vector.shape_cast %26 : vector<8x16xf32> to vector<1x1x1x1x1x8x16xf32>
    tpu.vector_store %arg4[%c0_43, %c0_44, %c0_45, %c0_46, %c1_47, %c0_48, %c0_49], %29 {strides = array<i32>} : memref<2x1x1x2x4x8x16xf32, #tpu.memory_space<vmem>>, vector<1x1x1x1x1x8x16xf32>,
    %30 = vector.extract_strided_slice %25 {offsets = [12, 0], sizes = [4, 16], strides = [1, 1]} : vector<16x16xf32> to vector<4x16xf32>
    %c1_50 = arith.constant 1 : index
    %c0_51 = arith.constant 0 : index
    %c0_52 = arith.constant 0 : index
    %c0_53 = arith.constant 0 : index
    %c1_54 = arith.constant 1 : index
    %c0_55 = arith.constant 0 : index
    %c0_56 = arith.constant 0 : index
    %31 = vector.load %arg4[%c1_50, %c0_51, %c0_52, %c0_53, %c1_54, %c0_55, %c0_56] : memref<2x1x1x2x4x8x16xf32, #tpu.memory_space<vmem>>, vector<1x1x1x1x1x4x16xf32>
    %32 = vector.shape_cast %31 : vector<1x1x1x1x1x4x16xf32> to vector<4x16xf32>
    %33 = vector.shape_cast %30 : vector<4x16xf32> to vector<1x1x1x1x1x4x16xf32>
    tpu.vector_store %arg4[%c1_50, %c0_51, %c0_52, %c0_53, %c1_54, %c0_55, %c0_56], %33 {strides = array<i32>} : memref<2x1x1x2x4x8x16xf32, #tpu.memory_space<vmem>>, vector<1x1x1x1x1x4x16xf32>,
    %34 = vector.extract_strided_slice %25 {offsets = [0, 0], sizes = [4, 16], strides = [1, 1]} : vector<16x16xf32> to vector<4x16xf32>
    %c1_57 = arith.constant 1 : index
    %c0_58 = arith.constant 0 : index
    %c0_59 = arith.constant 0 : index
    %c0_60 = arith.constant 0 : index
    %c1_61 = arith.constant 1 : index
    %c4_62 = arith.constant 4 : index
    %c0_63 = arith.constant 0 : index
    %35 = vector.load %arg4[%c1_57, %c0_58, %c0_59, %c0_60, %c1_61, %c4_62, %c0_63] : memref<2x1x1x2x4x8x16xf32, #tpu.memory_space<vmem>>, vector<1x1x1x1x1x4x16xf32>
    %36 = vector.shape_cast %35 : vector<1x1x1x1x1x4x16xf32> to vector<4x16xf32>
    %37 = vector.shape_cast %34 : vector<4x16xf32> to vector<1x1x1x1x1x4x16xf32>
    tpu.vector_store %arg4[%c1_57, %c0_58, %c0_59, %c0_60, %c1_61, %c4_62, %c0_63], %37 {strides = array<i32>} : memref<2x1x1x2x4x8x16xf32, #tpu.memory_space<vmem>>, vector<1x1x1x1x1x4x16xf32>,
    %38 = vector.extract_strided_slice %24 {offsets = [8, 0], sizes = [8, 16], strides = [1, 1]} : vector<16x16xf32> to vector<8x16xf32>
    %c0_64 = arith.constant 0 : index
    %c0_65 = arith.constant 0 : index
    %c0_66 = arith.constant 0 : index
    %c1_67 = arith.constant 1 : index
    %c1_68 = arith.constant 1 : index
    %c0_69 = arith.constant 0 : index
    %c0_70 = arith.constant 0 : index
    %39 = vector.load %arg4[%c0_64, %c0_65, %c0_66, %c1_67, %c1_68, %c0_69, %c0_70] : memref<2x1x1x2x4x8x16xf32, #tpu.memory_space<vmem>>, vector<1x1x1x1x1x8x16xf32>
    %40 = vector.shape_cast %39 : vector<1x1x1x1x1x8x16xf32> to vector<8x16xf32>
    %41 = vector.shape_cast %38 : vector<8x16xf32> to vector<1x1x1x1x1x8x16xf32>
    tpu.vector_store %arg4[%c0_64, %c0_65, %c0_66, %c1_67, %c1_68, %c0_69, %c0_70], %41 {strides = array<i32>} : memref<2x1x1x2x4x8x16xf32, #tpu.memory_space<vmem>>, vector<1x1x1x1x1x8x16xf32>,
    %42 = vector.extract_strided_slice %25 {offsets = [4, 0], sizes = [8, 16], strides = [1, 1]} : vector<16x16xf32> to vector<8x16xf32>
    %c1_71 = arith.constant 1 : index
    %c0_72 = arith.constant 0 : index
    %c0_73 = arith.constant 0 : index
    %c1_74 = arith.constant 1 : index
    %c1_75 = arith.constant 1 : index
    %c0_76 = arith.constant 0 : index
    %c0_77 = arith.constant 0 : index
    %43 = vector.load %arg4[%c1_71, %c0_72, %c0_73, %c1_74, %c1_75, %c0_76, %c0_77] : memref<2x1x1x2x4x8x16xf32, #tpu.memory_space<vmem>>, vector<1x1x1x1x1x8x16xf32>
    %44 = vector.shape_cast %43 : vector<1x1x1x1x1x8x16xf32> to vector<8x16xf32>
    %45 = vector.shape_cast %42 : vector<8x16xf32> to vector<1x1x1x1x1x8x16xf32>
    tpu.vector_store %arg4[%c1_71, %c0_72, %c0_73, %c1_74, %c1_75, %c0_76, %c0_77], %45 {strides = array<i32>} : memref<2x1x1x2x4x8x16xf32, #tpu.memory_space<vmem>>, vector<1x1x1x1x1x8x16xf32>,
    %c0_78 = arith.constant 0 : index
    %c0_79 = arith.constant 0 : index
    %c2 = arith.constant 2 : index
    %c0_80 = arith.constant 0 : index
    %c0_81 = arith.constant 0 : index
    %46 = vector.load %arg3[%c0_78, %c0_79, %c2, %c0_80, %c0_81] : memref<1x1x4x16x16xf32, #tpu.memory_space<vmem>>, vector<1x1x1x16x16xf32>
    %47 = vector.shape_cast %46 : vector<1x1x1x16x16xf32> to vector<16x16xf32>
    %c4_i32_82 = arith.constant 4 : i32
    %48 = tpu.dynamic_rotate %47 by %c4_i32_82 dim 1 : vector<16x16xf32>, i32 -> vector<16x16xf32>
    %49 = vector.extract_strided_slice %47 {offsets = [0, 0], sizes = [8, 16], strides = [1, 1]} : vector<16x16xf32> to vector<8x16xf32>
    %c0_83 = arith.constant 0 : index
    %c0_84 = arith.constant 0 : index
    %c0_85 = arith.constant 0 : index
    %c0_86 = arith.constant 0 : index
    %c2_87 = arith.constant 2 : index
    %c0_88 = arith.constant 0 : index
    %c0_89 = arith.constant 0 : index
    %50 = vector.load %arg4[%c0_83, %c0_84, %c0_85, %c0_86, %c2_87, %c0_88, %c0_89] : memref<2x1x1x2x4x8x16xf32, #tpu.memory_space<vmem>>, vector<1x1x1x1x1x8x16xf32>
    %51 = vector.shape_cast %50 : vector<1x1x1x1x1x8x16xf32> to vector<8x16xf32>
    %52 = vector.shape_cast %49 : vector<8x16xf32> to vector<1x1x1x1x1x8x16xf32>
    tpu.vector_store %arg4[%c0_83, %c0_84, %c0_85, %c0_86, %c2_87, %c0_88, %c0_89], %52 {strides = array<i32>} : memref<2x1x1x2x4x8x16xf32, #tpu.memory_space<vmem>>, vector<1x1x1x1x1x8x16xf32>,
    %53 = vector.extract_strided_slice %48 {offsets = [12, 0], sizes = [4, 16], strides = [1, 1]} : vector<16x16xf32> to vector<4x16xf32>
    %c1_90 = arith.constant 1 : index
    %c0_91 = arith.constant 0 : index
    %c0_92 = arith.constant 0 : index
    %c0_93 = arith.constant 0 : index
    %c2_94 = arith.constant 2 : index
    %c0_95 = arith.constant 0 : index
    %c0_96 = arith.constant 0 : index
    %54 = vector.load %arg4[%c1_90, %c0_91, %c0_92, %c0_93, %c2_94, %c0_95, %c0_96] : memref<2x1x1x2x4x8x16xf32, #tpu.memory_space<vmem>>, vector<1x1x1x1x1x4x16xf32>
    %55 = vector.shape_cast %54 : vector<1x1x1x1x1x4x16xf32> to vector<4x16xf32>
    %56 = vector.shape_cast %53 : vector<4x16xf32> to vector<1x1x1x1x1x4x16xf32>
    tpu.vector_store %arg4[%c1_90, %c0_91, %c0_92, %c0_93, %c2_94, %c0_95, %c0_96], %56 {strides = array<i32>} : memref<2x1x1x2x4x8x16xf32, #tpu.memory_space<vmem>>, vector<1x1x1x1x1x4x16xf32>,
    %57 = vector.extract_strided_slice %48 {offsets = [0, 0], sizes = [4, 16], strides = [1, 1]} : vector<16x16xf32> to vector<4x16xf32>
    %c1_97 = arith.constant 1 : index
    %c0_98 = arith.constant 0 : index
    %c0_99 = arith.constant 0 : index
    %c0_100 = arith.constant 0 : index
    %c2_101 = arith.constant 2 : index
    %c4_102 = arith.constant 4 : index
    %c0_103 = arith.constant 0 : index
    %58 = vector.load %arg4[%c1_97, %c0_98, %c0_99, %c0_100, %c2_101, %c4_102, %c0_103] : memref<2x1x1x2x4x8x16xf32, #tpu.memory_space<vmem>>, vector<1x1x1x1x1x4x16xf32>
    %59 = vector.shape_cast %58 : vector<1x1x1x1x1x4x16xf32> to vector<4x16xf32>
    %60 = vector.shape_cast %57 : vector<4x16xf32> to vector<1x1x1x1x1x4x16xf32>
    tpu.vector_store %arg4[%c1_97, %c0_98, %c0_99, %c0_100, %c2_101, %c4_102, %c0_103], %60 {strides = array<i32>} : memref<2x1x1x2x4x8x16xf32, #tpu.memory_space<vmem>>, vector<1x1x1x1x1x4x16xf32>,
    %61 = vector.extract_strided_slice %47 {offsets = [8, 0], sizes = [8, 16], strides = [1, 1]} : vector<16x16xf32> to vector<8x16xf32>
    %c0_104 = arith.constant 0 : index
    %c0_105 = arith.constant 0 : index
    %c0_106 = arith.constant 0 : index
    %c1_107 = arith.constant 1 : index
    %c2_108 = arith.constant 2 : index
    %c0_109 = arith.constant 0 : index
    %c0_110 = arith.constant 0 : index
    %62 = vector.load %arg4[%c0_104, %c0_105, %c0_106, %c1_107, %c2_108, %c0_109, %c0_110] : memref<2x1x1x2x4x8x16xf32, #tpu.memory_space<vmem>>, vector<1x1x1x1x1x8x16xf32>
    %63 = vector.shape_cast %62 : vector<1x1x1x1x1x8x16xf32> to vector<8x16xf32>
    %64 = vector.shape_cast %61 : vector<8x16xf32> to vector<1x1x1x1x1x8x16xf32>
    tpu.vector_store %arg4[%c0_104, %c0_105, %c0_106, %c1_107, %c2_108, %c0_109, %c0_110], %64 {strides = array<i32>} : memref<2x1x1x2x4x8x16xf32, #tpu.memory_space<vmem>>, vector<1x1x1x1x1x8x16xf32>,
    %65 = vector.extract_strided_slice %48 {offsets = [4, 0], sizes = [8, 16], strides = [1, 1]} : vector<16x16xf32> to vector<8x16xf32>
    %c1_111 = arith.constant 1 : index
    %c0_112 = arith.constant 0 : index
    %c0_113 = arith.constant 0 : index
    %c1_114 = arith.constant 1 : index
    %c2_115 = arith.constant 2 : index
    %c0_116 = arith.constant 0 : index
    %c0_117 = arith.constant 0 : index
    %66 = vector.load %arg4[%c1_111, %c0_112, %c0_113, %c1_114, %c2_115, %c0_116, %c0_117] : memref<2x1x1x2x4x8x16xf32, #tpu.memory_space<vmem>>, vector<1x1x1x1x1x8x16xf32>
    %67 = vector.shape_cast %66 : vector<1x1x1x1x1x8x16xf32> to vector<8x16xf32>
    %68 = vector.shape_cast %65 : vector<8x16xf32> to vector<1x1x1x1x1x8x16xf32>
    tpu.vector_store %arg4[%c1_111, %c0_112, %c0_113, %c1_114, %c2_115, %c0_116, %c0_117], %68 {strides = array<i32>} : memref<2x1x1x2x4x8x16xf32, #tpu.memory_space<vmem>>, vector<1x1x1x1x1x8x16xf32>,
    %c0_118 = arith.constant 0 : index
    %c0_119 = arith.constant 0 : index
    %c3 = arith.constant 3 : index
    %c0_120 = arith.constant 0 : index
    %c0_121 = arith.constant 0 : index
    %69 = vector.load %arg3[%c0_118, %c0_119, %c3, %c0_120, %c0_121] : memref<1x1x4x16x16xf32, #tpu.memory_space<vmem>>, vector<1x1x1x16x16xf32>
    %70 = vector.shape_cast %69 : vector<1x1x1x16x16xf32> to vector<16x16xf32>
    %c4_i32_122 = arith.constant 4 : i32
    %71 = tpu.dynamic_rotate %70 by %c4_i32_122 dim 1 : vector<16x16xf32>, i32 -> vector<16x16xf32>
    %72 = vector.extract_strided_slice %70 {offsets = [0, 0], sizes = [8, 16], strides = [1, 1]} : vector<16x16xf32> to vector<8x16xf32>
    %c0_123 = arith.constant 0 : index
    %c0_124 = arith.constant 0 : index
    %c0_125 = arith.constant 0 : index
    %c0_126 = arith.constant 0 : index
    %c3_127 = arith.constant 3 : index
    %c0_128 = arith.constant 0 : index
    %c0_129 = arith.constant 0 : index
    %73 = vector.load %arg4[%c0_123, %c0_124, %c0_125, %c0_126, %c3_127, %c0_128, %c0_129] : memref<2x1x1x2x4x8x16xf32, #tpu.memory_space<vmem>>, vector<1x1x1x1x1x8x16xf32>
    %74 = vector.shape_cast %73 : vector<1x1x1x1x1x8x16xf32> to vector<8x16xf32>
    %75 = vector.shape_cast %72 : vector<8x16xf32> to vector<1x1x1x1x1x8x16xf32>
    tpu.vector_store %arg4[%c0_123, %c0_124, %c0_125, %c0_126, %c3_127, %c0_128, %c0_129], %75 {strides = array<i32>} : memref<2x1x1x2x4x8x16xf32, #tpu.memory_space<vmem>>, vector<1x1x1x1x1x8x16xf32>,
    %76 = vector.extract_strided_slice %71 {offsets = [12, 0], sizes = [4, 16], strides = [1, 1]} : vector<16x16xf32> to vector<4x16xf32>
    %c1_130 = arith.constant 1 : index
    %c0_131 = arith.constant 0 : index
    %c0_132 = arith.constant 0 : index
    %c0_133 = arith.constant 0 : index
    %c3_134 = arith.constant 3 : index
    %c0_135 = arith.constant 0 : index
    %c0_136 = arith.constant 0 : index
    %77 = vector.load %arg4[%c1_130, %c0_131, %c0_132, %c0_133, %c3_134, %c0_135, %c0_136] : memref<2x1x1x2x4x8x16xf32, #tpu.memory_space<vmem>>, vector<1x1x1x1x1x4x16xf32>
    %78 = vector.shape_cast %77 : vector<1x1x1x1x1x4x16xf32> to vector<4x16xf32>
    %79 = vector.shape_cast %76 : vector<4x16xf32> to vector<1x1x1x1x1x4x16xf32>
    tpu.vector_store %arg4[%c1_130, %c0_131, %c0_132, %c0_133, %c3_134, %c0_135, %c0_136], %79 {strides = array<i32>} : memref<2x1x1x2x4x8x16xf32, #tpu.memory_space<vmem>>, vector<1x1x1x1x1x4x16xf32>,
    %80 = vector.extract_strided_slice %71 {offsets = [0, 0], sizes = [4, 16], strides = [1, 1]} : vector<16x16xf32> to vector<4x16xf32>
    %c1_137 = arith.constant 1 : index
    %c0_138 = arith.constant 0 : index
    %c0_139 = arith.constant 0 : index
    %c0_140 = arith.constant 0 : index
    %c3_141 = arith.constant 3 : index
    %c4_142 = arith.constant 4 : index
    %c0_143 = arith.constant 0 : index
    %81 = vector.load %arg4[%c1_137, %c0_138, %c0_139, %c0_140, %c3_141, %c4_142, %c0_143] : memref<2x1x1x2x4x8x16xf32, #tpu.memory_space<vmem>>, vector<1x1x1x1x1x4x16xf32>
    %82 = vector.shape_cast %81 : vector<1x1x1x1x1x4x16xf32> to vector<4x16xf32>
    %83 = vector.shape_cast %80 : vector<4x16xf32> to vector<1x1x1x1x1x4x16xf32>
    tpu.vector_store %arg4[%c1_137, %c0_138, %c0_139, %c0_140, %c3_141, %c4_142, %c0_143], %83 {strides = array<i32>} : memref<2x1x1x2x4x8x16xf32, #tpu.memory_space<vmem>>, vector<1x1x1x1x1x4x16xf32>,
    %84 = vector.extract_strided_slice %70 {offsets = [8, 0], sizes = [8, 16], strides = [1, 1]} : vector<16x16xf32> to vector<8x16xf32>
    %c0_144 = arith.constant 0 : index
    %c0_145 = arith.constant 0 : index
    %c0_146 = arith.constant 0 : index
    %c1_147 = arith.constant 1 : index
    %c3_148 = arith.constant 3 : index
    %c0_149 = arith.constant 0 : index
    %c0_150 = arith.constant 0 : index
    %85 = vector.load %arg4[%c0_144, %c0_145, %c0_146, %c1_147, %c3_148, %c0_149, %c0_150] : memref<2x1x1x2x4x8x16xf32, #tpu.memory_space<vmem>>, vector<1x1x1x1x1x8x16xf32>
    %86 = vector.shape_cast %85 : vector<1x1x1x1x1x8x16xf32> to vector<8x16xf32>
    %87 = vector.shape_cast %84 : vector<8x16xf32> to vector<1x1x1x1x1x8x16xf32>
    tpu.vector_store %arg4[%c0_144, %c0_145, %c0_146, %c1_147, %c3_148, %c0_149, %c0_150], %87 {strides = array<i32>} : memref<2x1x1x2x4x8x16xf32, #tpu.memory_space<vmem>>, vector<1x1x1x1x1x8x16xf32>,
    %88 = vector.extract_strided_slice %71 {offsets = [4, 0], sizes = [8, 16], strides = [1, 1]} : vector<16x16xf32> to vector<8x16xf32>
    %c1_151 = arith.constant 1 : index
    %c0_152 = arith.constant 0 : index
    %c0_153 = arith.constant 0 : index
    %c1_154 = arith.constant 1 : index
    %c3_155 = arith.constant 3 : index
    %c0_156 = arith.constant 0 : index
    %c0_157 = arith.constant 0 : index
    %89 = vector.load %arg4[%c1_151, %c0_152, %c0_153, %c1_154, %c3_155, %c0_156, %c0_157] : memref<2x1x1x2x4x8x16xf32, #tpu.memory_space<vmem>>, vector<1x1x1x1x1x8x16xf32>
    %90 = vector.shape_cast %89 : vector<1x1x1x1x1x8x16xf32> to vector<8x16xf32>
    %91 = vector.shape_cast %88 : vector<8x16xf32> to vector<1x1x1x1x1x8x16xf32>
    tpu.vector_store %arg4[%c1_151, %c0_152, %c0_153, %c1_154, %c3_155, %c0_156, %c0_157], %91 {strides = array<i32>} : memref<2x1x1x2x4x8x16xf32, #tpu.memory_space<vmem>>, vector<1x1x1x1x1x8x16xf32>,
    return
  }
  func.func @transform_0(%arg0: i32, %arg1: i32, %arg2: i32) -> (i32, i32, i32, i32, i32) {
    %c0_i32 = arith.constant 0 : i32
    %c0_i32_0 = arith.constant 0 : i32
    %c0_i32_1 = arith.constant 0 : i32
    return %arg0, %arg1, %arg2, %c0_i32, %c0_i32_0 : i32, i32, i32, i32, i32
  }
  func.func @transform_1(%arg0: i32, %arg1: i32, %arg2: i32) -> (i32, i32, i32, i32, i32, i32, i32) {
    %c0_i32 = arith.constant 0 : i32
    %c0_i32_0 = arith.constant 0 : i32
    %c0_i32_1 = arith.constant 0 : i32
    %c0_i32_2 = arith.constant 0 : i32
    %c0_i32_3 = arith.constant 0 : i32
    return %c0_i32, %arg0, %arg1, %c0_i32_0, %arg2, %c0_i32_1, %c0_i32_2 : i32, i32, i32, i32, i32, i32, i32
  }
}

</mosaic_0001>

<llo_original>
// kernel: fwd.1
$region0: #{fwd.1}
  #allocation0 [shape = 'u32[]', space=smem, size = 0x4, offset = 0x4, fixed_abs, tag = 'smem constant byte address 0x4 - core index']
  #allocation1 [shape = 'u32[144,128]{1,0:T(1,128)}', space=vmem, size = 0x12000, scoped, tag = 'internal scratch']
  %s0 = inlined_call_operand.hbm [shape: f32[2,2,4,16,16], index: 0, kind: input, shape index: {}]
  %s1 = inlined_call_operand.vmem [shape: f32[2,2,2,2,4,8,16], index: 1, kind: output, shape index: {}]
  %s2 = sld [smem:[#allocation0]]
  $region75: #{fwd.1} parent=0
    _
  %s4 = ssub.s32 1, %s2
  %s5 = scalar_select 0, %s4, %s2
  $region1: #{fwd.1} parent=0
    #allocation2 [shape = 'u8[65536]{0}', space=vmem, size = 0x10000, scoped, tag = 'input window, operand 0']
    #allocation3 [shape = 's32[2]{0}', space=sflag, size = 0x8, scoped, tag = 'scoped memory for fwd.1']
    #allocation4 [shape = 'u8[131072]{0}', space=vmem, size = 0x20000, scoped, tag = 'output window, operand 0']
    %6 = vsyncpa [#allocation3], 0
    %s7 = scalar_lea.sflag [#allocation3], 1
    %8 = vsyncpa %s7, 0
    loop: start=0, step=1, limit=6
    $region2: #{fwd.1} parent=1 // loop_pre_header
      _
    $region3: #{fwd.1} parent=1 // loop_header
      %s10 = sphi 0, %s14
      %p11 = scmp.ge.s32.totalorder %s10, 6
      %s17 = sphi 0, %s36
      %s18 = sphi 0, %s32
      %s19 = sphi 0, %s28
      %s20 = sphi 0, %s17
      %s21 = sphi 0, %s18
      %s22 = sphi 0, %s19
      %s23 = sphi 0, %s20
      %s24 = sphi 0, %s21
      %s25 = sphi 0, %s22
      %s43 = sphi 0, %s45
      %s46 = sphi 0, %s43
      %s47 = sphi 0, %s46
      %s63 = sphi 0, %s47
      %s73 = sphi 0, %s75
      %s76 = sphi 0, %s73
      %s77 = sphi 0, %s76
      %s93 = sphi 0, %s77
    $region4: #{fwd.1} parent=1 // loop_header_branch
      %13 = sbr.rel (%p11) target = $region8
    $region5: #{fwd.1} parent=1 // loop_body
      %s15 = ssub.s32 %s10, 1
      %s16 = ssub.s32 %s10, 2
      %s26 = sadd.s32 1, %s19
      %p27 = scmp.ge.s32.totalorder %s26, 1
      %s28 = scalar_select %p27, 0, %s26
      %s29 = sadd.s32 1, %s18
      %s30 = scalar_select %p27, %s29, %s18
      %p31 = scmp.ge.s32.totalorder %s30, 2
      %s32 = scalar_select %p31, 0, %s30
      %s33 = sadd.s32 1, %s17
      %s34 = scalar_select %p31, %s33, %s17
      %p35 = scmp.ge.s32.totalorder %s34, 2
      %s36 = scalar_select %p35, 0, %s34
      %s37 = ssub.s32 %s17, %s36
      %s38 = ssub.s32 %s18, %s32
      %s39 = sor.u32 %s37, %s38
      %s40 = ssub.s32 %s19, %s28
      %s41 = sor.u32 %s39, %s40
      %p42 = scmp.eq.s32.totalorder %s41, 0
      %s44 = sadd.s32 %s43, 1
      %s45 = scalar_select %p42, %s43, %s44
      %p48 = pneg %p42
      %p49 = scmp.eq.s32.totalorder %s10, 3
      %p50 = por %p48, %p49
      %p51 = scmp.ne.s32.totalorder %s43, %s46
      %p52 = scmp.eq.s32.totalorder %s10, 0
      %p53 = por %p51, %p52
      %p54 = scmp.ne.s32.totalorder %s43, %s46
      %p55 = scmp.eq.s32.totalorder %s15, 3
      %p56 = por %p54, %p55
      %p57 = scmp.ne.s32.totalorder %s46, %s47
      %p58 = scmp.eq.s32.totalorder %s15, 0
      %p59 = por %p57, %p58
      %p60 = scmp.ne.s32.totalorder %s46, %s47
      %p61 = scmp.eq.s32.totalorder %s16, 3
      %p62 = por %p60, %p61
      %p64 = scmp.ne.s32.totalorder %s47, %s63
      %p65 = scmp.eq.s32.totalorder %s16, 0
      %p66 = por %p64, %p65
      %s67 = ssub.s32 %s17, %s36
      %s68 = ssub.s32 %s18, %s32
      %s69 = sor.u32 %s67, %s68
      %s70 = ssub.s32 %s19, %s28
      %s71 = sor.u32 %s69, %s70
      %p72 = scmp.eq.s32.totalorder %s71, 0
      %s74 = sadd.s32 %s73, 1
      %s75 = scalar_select %p72, %s73, %s74
      %p78 = pneg %p72
      %p79 = scmp.eq.s32.totalorder %s10, 3
      %p80 = por %p78, %p79
      %p81 = scmp.ne.s32.totalorder %s73, %s76
      %p82 = scmp.eq.s32.totalorder %s10, 0
      %p83 = por %p81, %p82
      %p84 = scmp.ne.s32.totalorder %s73, %s76
      %p85 = scmp.eq.s32.totalorder %s15, 3
      %p86 = por %p84, %p85
      %p87 = scmp.ne.s32.totalorder %s76, %s77
      %p88 = scmp.eq.s32.totalorder %s15, 0
      %p89 = por %p87, %p88
      %p90 = scmp.ne.s32.totalorder %s76, %s77
      %p91 = scmp.eq.s32.totalorder %s16, 3
      %p92 = por %p90, %p91
      %p94 = scmp.ne.s32.totalorder %s77, %s93
      %p95 = scmp.eq.s32.totalorder %s16, 0
      %p96 = por %p94, %p95
      %p97 = scmp.le.s32.totalorder 1, %s10
      %p98 = scmp.lt.s32.totalorder %s10, 5
      %p99 = pnand %p97, %p98
      %p100 = pneg %p99
      // Predicated region
      $region9: #{fwd.1} parent=5 // pred_check
        _
      $region10: #{fwd.1} parent=5 // pred_check_branch
        %102 = sbr.rel (%p99) target = $region12
      $region11: #{fwd.1} parent=5 // pred_region
        %s103 = ssub.s32 %s10, 1
      $region12: #{fwd.1} parent=5 // pred_fallthru
        _
      %p104 = scmp.lt.s32.totalorder %s10, 4
      // Predicated region
      $region13: #{fwd.1} parent=5 // pred_check
        %p105 = pneg %p104
      $region14: #{fwd.1} parent=5 // pred_check_branch
        %107 = sbr.rel (%p105) target = $region16
      $region15: #{fwd.1} parent=5 // pred_region
        // Predicated region
        $region17: #{fwd.1} parent=15 // pred_check
          %p108 = pneg %p53
        $region18: #{fwd.1} parent=15 // pred_check_branch
          %110 = sbr.rel (%p108) target = $region20
        $region19: #{fwd.1} parent=15 // pred_region
          %s111 = sand.u32 %s43, 1
          %s112 = scalar_lea.sflag [#allocation3], %s111
          %s113 = sand.u32 %s43, 1
          %s114 = smul.addr %s113, 64
          %s115 = scalar_lea.vmem [#allocation2], %s114
          %s116 = smul.u32 4, %s19
          %s118 = ssub.s32 1024, 1024
          %119 = vsyncadd %s112, %s118
          %s120 = smul.addr %s116, 2
          %s121 = smul.addr %s18, 8
          %s122 = sadd.s32 %s120, %s121
          %s123 = smul.addr %s17, 16
          %s124 = sadd.s32 %s122, %s123
          %s125 = smul.addr %s124, 128
          %s126 = scalar_lea.hbm %s0, %s125
          %s127 = sshll.u32 %s115, 4
          %s128 = int_to_ptr.vmem [resolvable:$true] %s127
          %133 = dma.hbm_to_vmem [thread:$0]  %s126, 1024, %s128, %s112, 128, 128, 8
        $region20: #{fwd.1} parent=15 // pred_fallthru
          _
      $region16: #{fwd.1} parent=5 // pred_fallthru
        _
      %p134 = scmp.le.s32.totalorder 1, %s10
      %p135 = scmp.lt.s32.totalorder %s10, 5
      %p136 = pnand %p134, %p135
      %p137 = pneg %p136
      // Predicated region
      $region21: #{fwd.1} parent=5 // pred_check
        _
      $region22: #{fwd.1} parent=5 // pred_check_branch
        %139 = sbr.rel (%p136) target = $region24
      $region23: #{fwd.1} parent=5 // pred_region
        %s140 = ssub.s32 %s10, 1
        %s141 = sand.u32 %s46, 1
        %s142 = scalar_lea.sflag [#allocation3], %s141
        %s143 = sand.u32 %s46, 1
        %s144 = smul.addr %s143, 64
        %s145 = scalar_lea.vmem [#allocation2], %s144
        // Predicated region
        $region25: #{fwd.1} parent=23 // pred_check
          %p146 = pneg %p59
        $region26: #{fwd.1} parent=23 // pred_check_branch
          %148 = sbr.rel (%p146) target = $region28
        $region27: #{fwd.1} parent=23 // pred_region
          %149 = dma.done %s142, 1024
        $region28: #{fwd.1} parent=23 // pred_fallthru
          _
        %s150 = sand.u32 %s46, 1
        %s151 = scalar_lea.sflag [#allocation3], %s150
        %s152 = sand.u32 %s46, 1
        %s153 = smul.addr %s152, 64
        %s154 = scalar_lea.vmem [#allocation2], %s153
        %p155 = pneg %p59
        %p156 = pneg %p56
        %p157 = pneg %p89
        %p158 = pneg %p86
        %s159 = sand.u32 %s76, 1
        %s160 = sand.u32 %s76, 1
        %s161 = smul.addr %s160, 128
        %s162 = scalar_lea.vmem [#allocation4], %s161
        %s163 = smul.u32 4, %s22
        %s164 = smul.u32 4, %s22
        %v165 = vld [vmem:[%s145] sm:$0xff]
        %v166 = vld [vmem:[%s145 + $0x8] sm:$0xff]
        %vm167 = vcmask 1047680
        %168 = vrot.lane.b32.xlu0 %v165, 16
        %v169 = vpop.permute.xlu0 %168
        %v170 = vsel %vm167, %v169, %v165
        %171 = vrot.lane.b32.xlu0 %v166, 16
        %v172 = vpop.permute.xlu0 %171
        %v173 = vsel %vm167, %v172, %v166
        %174 = vrot.lane.b32.xlu0 %v170, 16
        %v175 = vpop.permute.xlu0 %174
        %176 = vrot.lane.b32.xlu0 %v173, 16
        %v177 = vpop.permute.xlu0 %176
        %v178 = vsel %vm167, %v175, %v165
        %v179 = vsel %vm167, %v177, %v166
        %vm180 = vcmask 130048
        %181 = vst.msk [vmem:[%s162] sm:$0xff] %vm180, %v165
        %183 = vrot.lane.b32.xlu0 %v179, 116
        %v184 = vpop.permute.xlu0 %183
        %s186 = scalar_lea.vmem %s162, 64 [#allocation4]
        %vm187 = vcmask 130052
        %188 = vst.msk [vmem:[%s186 - $0x4] sm:$0xf0] %vm187, %v184
        %190 = vrot.lane.b32.xlu0 %v178, 116
        %v191 = vpop.permute.xlu0 %190
        %vm193 = vcmask 125952
        %194 = vst.msk [vmem:[%s186 + $0x4] sm:$0xf] %vm193, %v191
        %s195 = scalar_lea.vmem %s162, 32 [#allocation4]
        %196 = vst.msk [vmem:[%s195] sm:$0xff] %vm180, %v166
        %s197 = scalar_lea.vmem %s162, 96 [#allocation4]
        %198 = vst.msk [vmem:[%s197 - $0x4] sm:$0xf0] %vm187, %v191
        %199 = vst.msk [vmem:[%s197 + $0x4] sm:$0xf] %vm193, %v184
        %s200 = scalar_lea.vmem %s145, 16 [#allocation2]
        %v201 = vld [vmem:[%s200] sm:$0xff]
        %v202 = vld [vmem:[%s200 + $0x8] sm:$0xff]
        %203 = vrot.lane.b32.xlu0 %v201, 16
        %v204 = vpop.permute.xlu0 %203
        %v205 = vsel %vm167, %v204, %v201
        %206 = vrot.lane.b32.xlu0 %v202, 16
        %v207 = vpop.permute.xlu0 %206
        %v208 = vsel %vm167, %v207, %v202
        %209 = vrot.lane.b32.xlu0 %v205, 16
        %v210 = vpop.permute.xlu0 %209
        %211 = vrot.lane.b32.xlu0 %v208, 16
        %v212 = vpop.permute.xlu0 %211
        %v213 = vsel %vm167, %v210, %v201
        %v214 = vsel %vm167, %v212, %v202
        %s215 = scalar_lea.vmem %s162, 8 [#allocation4]
        %216 = vst.msk [vmem:[%s215] sm:$0xff] %vm180, %v201
        %218 = vrot.lane.b32.xlu0 %v214, 116
        %v219 = vpop.permute.xlu0 %218
        %s221 = scalar_lea.vmem %s162, 72 [#allocation4]
        %222 = vst.msk [vmem:[%s221 - $0x4] sm:$0xf0] %vm187, %v219
        %224 = vrot.lane.b32.xlu0 %v213, 116
        %v225 = vpop.permute.xlu0 %224
        %227 = vst.msk [vmem:[%s221 + $0x4] sm:$0xf] %vm193, %v225
        %s228 = scalar_lea.vmem %s162, 40 [#allocation4]
        %229 = vst.msk [vmem:[%s228] sm:$0xff] %vm180, %v202
        %s230 = scalar_lea.vmem %s162, 104 [#allocation4]
        %231 = vst.msk [vmem:[%s230 - $0x4] sm:$0xf0] %vm187, %v225
        %232 = vst.msk [vmem:[%s230 + $0x4] sm:$0xf] %vm193, %v219
        %s233 = scalar_lea.vmem %s145, 32 [#allocation2]
        %v234 = vld [vmem:[%s233] sm:$0xff]
        %v235 = vld [vmem:[%s233 + $0x8] sm:$0xff]
        %236 = vrot.lane.b32.xlu0 %v234, 16
        %v237 = vpop.permute.xlu0 %236
        %v238 = vsel %vm167, %v237, %v234
        %239 = vrot.lane.b32.xlu0 %v235, 16
        %v240 = vpop.permute.xlu0 %239
        %v241 = vsel %vm167, %v240, %v235
        %242 = vrot.lane.b32.xlu0 %v238, 16
        %v243 = vpop.permute.xlu0 %242
        %244 = vrot.lane.b32.xlu0 %v241, 16
        %v245 = vpop.permute.xlu0 %244
        %v246 = vsel %vm167, %v243, %v234
        %v247 = vsel %vm167, %v245, %v235
        %s248 = scalar_lea.vmem %s162, 16 [#allocation4]
        %249 = vst.msk [vmem:[%s248] sm:$0xff] %vm180, %v234
        %251 = vrot.lane.b32.xlu0 %v247, 116
        %v252 = vpop.permute.xlu0 %251
        %s254 = scalar_lea.vmem %s162, 80 [#allocation4]
        %255 = vst.msk [vmem:[%s254 - $0x4] sm:$0xf0] %vm187, %v252
        %257 = vrot.lane.b32.xlu0 %v246, 116
        %v258 = vpop.permute.xlu0 %257
        %260 = vst.msk [vmem:[%s254 + $0x4] sm:$0xf] %vm193, %v258
        %s261 = scalar_lea.vmem %s162, 48 [#allocation4]
        %262 = vst.msk [vmem:[%s261] sm:$0xff] %vm180, %v235
        %s263 = scalar_lea.vmem %s162, 112 [#allocation4]
        %264 = vst.msk [vmem:[%s263 - $0x4] sm:$0xf0] %vm187, %v258
        %265 = vst.msk [vmem:[%s263 + $0x4] sm:$0xf] %vm193, %v252
        %s266 = scalar_lea.vmem %s145, 48 [#allocation2]
        %v267 = vld [vmem:[%s266] sm:$0xff]
        %v268 = vld [vmem:[%s266 + $0x8] sm:$0xff]
        %269 = vrot.lane.b32.xlu0 %v267, 16
        %v270 = vpop.permute.xlu0 %269
        %v271 = vsel %vm167, %v270, %v267
        %272 = vrot.lane.b32.xlu0 %v268, 16
        %v273 = vpop.permute.xlu0 %272
        %v274 = vsel %vm167, %v273, %v268
        %275 = vrot.lane.b32.xlu0 %v271, 16
        %v276 = vpop.permute.xlu0 %275
        %277 = vrot.lane.b32.xlu0 %v274, 16
        %v278 = vpop.permute.xlu0 %277
        %v279 = vsel %vm167, %v276, %v267
        %v280 = vsel %vm167, %v278, %v268
        %s281 = scalar_lea.vmem %s162, 24 [#allocation4]
        %282 = vst.msk [vmem:[%s281] sm:$0xff] %vm180, %v267
        %284 = vrot.lane.b32.xlu0 %v280, 116
        %v285 = vpop.permute.xlu0 %284
        %s287 = scalar_lea.vmem %s162, 88 [#allocation4]
        %288 = vst.msk [vmem:[%s287 - $0x4] sm:$0xf0] %vm187, %v285
        %290 = vrot.lane.b32.xlu0 %v279, 116
        %v291 = vpop.permute.xlu0 %290
        %293 = vst.msk [vmem:[%s287 + $0x4] sm:$0xf] %vm193, %v291
        %s294 = scalar_lea.vmem %s162, 56 [#allocation4]
        %295 = vst.msk [vmem:[%s294] sm:$0xff] %vm180, %v268
        %s296 = scalar_lea.vmem %s162, 120 [#allocation4]
        %297 = vst.msk [vmem:[%s296 - $0x4] sm:$0xf0] %vm187, %v291
        %298 = vst.msk [vmem:[%s296 + $0x4] sm:$0xf] %vm193, %v285
        %s299 = sand.u32 %s76, 1
        %s300 = sand.u32 %s76, 1
        %s301 = smul.addr %s300, 128
        %s302 = scalar_lea.vmem [#allocation4], %s301
        // Predicated region
        $region29: #{fwd.1} parent=23 // pred_check
          %p303 = pneg %p86
        $region30: #{fwd.1} parent=23 // pred_check_branch
          %305 = sbr.rel (%p303) target = $region32
        $region31: #{fwd.1} parent=23 // pred_region
          %s306 = smul.u32 4, %s22
          %s307 = smul.addr %s21, 8
          %s308 = sadd.s32 %s306, %s307
          %s309 = smul.addr %s20, 16
          %s310 = sadd.s32 %s308, %s309
          %s311 = smul.addr %s310, 8
          %s312 = scalar_lea.vmem %s1, %s311
          // Predicated region
          $region33: #{fwd.1} parent=31 // pred_check
            _
          $region34: #{fwd.1} parent=31 // pred_check_branch
            %314 = sbr.rel (0) target = $region36
          $region35: #{fwd.1} parent=31 // pred_region
            // Predicated region
            $region37: #{fwd.1} parent=35 // pred_check
              _
            $region38: #{fwd.1} parent=35 // pred_check_branch
              %316 = sbr.rel (0) target = $region40
            $region39: #{fwd.1} parent=35 // pred_region
              // Predicated region
              $region52: #{fwd.1} parent=39 // pred_check
                _
              $region53: #{fwd.1} parent=39 // pred_check_branch
                %362 = sbr.rel (0) target = $region55
              $region54: #{fwd.1} parent=39 // pred_region
                loop: start=0, step=1, limit=1
                $region56: #{fwd.1} parent=54 // loop_pre_header
                  _
                $region57: #{fwd.1} parent=54 // loop_header
                  %s364 = sphi 0, %s368
                  %p365 = scmp.ge.s32.totalorder %s364, 1
                  %s369 = sphi %s302, %s302
                  %s370 = sphi %s312, %s312
                $region58: #{fwd.1} parent=54 // loop_header_branch
                  %367 = sbr.rel (%p365) target = $region62
                $region59: #{fwd.1} parent=54 // loop_body
                  %v371 = vld [vmem:[%s369] sm:$0xff]
                  %372 = vst [vmem:[%s370] sm:$0xff] %v371
                  %v373 = vld [vmem:[%s369 + $0x8] sm:$0xff]
                  %374 = vst [vmem:[%s370 + $0x8] sm:$0xff] %v373
                  %v375 = vld [vmem:[%s369 + $0x10] sm:$0xff]
                  %376 = vst [vmem:[%s370 + $0x10] sm:$0xff] %v375
                  %v377 = vld [vmem:[%s369 + $0x18] sm:$0xff]
                  %378 = vst [vmem:[%s370 + $0x18] sm:$0xff] %v377
                  %v379 = vld [vmem:[%s369 + $0x20] sm:$0xff]
                  %380 = vst [vmem:[%s370 + $0x20] sm:$0xff] %v379
                  %v381 = vld [vmem:[%s369 + $0x28] sm:$0xff]
                  %382 = vst [vmem:[%s370 + $0x28] sm:$0xff] %v381
                  %v383 = vld [vmem:[%s369 + $0x30] sm:$0xff]
                  %384 = vst [vmem:[%s370 + $0x30] sm:$0xff] %v383
                  %v385 = vld [vmem:[%s369 + $0x38] sm:$0xff]
                  %386 = vst [vmem:[%s370 + $0x38] sm:$0xff] %v385
                  %v387 = vld [vmem:[%s369 + $0x40] sm:$0xff]
                  %388 = vst [vmem:[%s370 + $0x100] sm:$0xff] %v387
                  %v389 = vld [vmem:[%s369 + $0x48] sm:$0xff]
                  %390 = vst [vmem:[%s370 + $0x108] sm:$0xff] %v389
                  %v391 = vld [vmem:[%s369 + $0x50] sm:$0xff]
                  %392 = vst [vmem:[%s370 + $0x110] sm:$0xff] %v391
                  %v393 = vld [vmem:[%s369 + $0x58] sm:$0xff]
                  %394 = vst [vmem:[%s370 + $0x118] sm:$0xff] %v393
                  %v395 = vld [vmem:[%s369 + $0x60] sm:$0xff]
                  %396 = vst [vmem:[%s370 + $0x120] sm:$0xff] %v395
                  %v397 = vld [vmem:[%s369 + $0x68] sm:$0xff]
                  %398 = vst [vmem:[%s370 + $0x128] sm:$0xff] %v397
                  %v399 = vld [vmem:[%s369 + $0x70] sm:$0xff]
                  %400 = vst [vmem:[%s370 + $0x130] sm:$0xff] %v399
                  %v401 = vld [vmem:[%s369 + $0x78] sm:$0xff]
                  %402 = vst [vmem:[%s370 + $0x138] sm:$0xff] %v401
                $region60: #{fwd.1} parent=54 // loop_footer
                  %s368 = sadd.s32 1, %s364
                $region61: #{fwd.1} parent=54 // loop_footer_branch
                  %363 = sbr.rel target = $region57
                $region62: #{fwd.1} parent=54 // loop_exit
                  _
              $region55: #{fwd.1} parent=39 // pred_fallthru
                _
              // Predicated region
              $region63: #{fwd.1} parent=39 // pred_check
                _
              $region64: #{fwd.1} parent=39 // pred_check_branch
                %404 = sbr.rel target = $region66
              $region65: #{fwd.1} parent=39 // pred_region
                _
              $region66: #{fwd.1} parent=39 // pred_fallthru
                _
            $region40: #{fwd.1} parent=35 // pred_fallthru
              _
            // Predicated region
            $region41: #{fwd.1} parent=35 // pred_check
              _
            $region42: #{fwd.1} parent=35 // pred_check_branch
              %318 = sbr.rel target = $region44
            $region43: #{fwd.1} parent=35 // pred_region
              %s320 = ssub.s32 256, 1
              loop: start=0, step=1, limit=1
              $region45: #{fwd.1} parent=43 // loop_pre_header
                _
              $region46: #{fwd.1} parent=43 // loop_header
                %s322 = sphi 0, %s326
                %p323 = scmp.ge.s32.totalorder %s322, 1
                %s327 = sphi %s302, %s302
                %s328 = sphi %s312, %s312
              $region47: #{fwd.1} parent=43 // loop_header_branch
                %325 = sbr.rel (%p323) target = $region51
              $region48: #{fwd.1} parent=43 // loop_body
                %v329 = vld [vmem:[%s327] sm:%s320]
                %330 = vst [vmem:[%s328] sm:%s320] %v329
                %v331 = vld [vmem:[%s327 + $0x8] sm:%s320]
                %332 = vst [vmem:[%s328 + $0x8] sm:%s320] %v331
                %v333 = vld [vmem:[%s327 + $0x10] sm:%s320]
                %334 = vst [vmem:[%s328 + $0x10] sm:%s320] %v333
                %v335 = vld [vmem:[%s327 + $0x18] sm:%s320]
                %336 = vst [vmem:[%s328 + $0x18] sm:%s320] %v335
                %v337 = vld [vmem:[%s327 + $0x20] sm:%s320]
                %338 = vst [vmem:[%s328 + $0x20] sm:%s320] %v337
                %v339 = vld [vmem:[%s327 + $0x28] sm:%s320]
                %340 = vst [vmem:[%s328 + $0x28] sm:%s320] %v339
                %v341 = vld [vmem:[%s327 + $0x30] sm:%s320]
                %342 = vst [vmem:[%s328 + $0x30] sm:%s320] %v341
                %v343 = vld [vmem:[%s327 + $0x38] sm:%s320]
                %344 = vst [vmem:[%s328 + $0x38] sm:%s320] %v343
                %v345 = vld [vmem:[%s327 + $0x40] sm:%s320]
                %346 = vst [vmem:[%s328 + $0x100] sm:%s320] %v345
                %v347 = vld [vmem:[%s327 + $0x48] sm:%s320]
                %348 = vst [vmem:[%s328 + $0x108] sm:%s320] %v347
                %v349 = vld [vmem:[%s327 + $0x50] sm:%s320]
                %350 = vst [vmem:[%s328 + $0x110] sm:%s320] %v349
                %v351 = vld [vmem:[%s327 + $0x58] sm:%s320]
                %352 = vst [vmem:[%s328 + $0x118] sm:%s320] %v351
                %v353 = vld [vmem:[%s327 + $0x60] sm:%s320]
                %354 = vst [vmem:[%s328 + $0x120] sm:%s320] %v353
                %v355 = vld [vmem:[%s327 + $0x68] sm:%s320]
                %356 = vst [vmem:[%s328 + $0x128] sm:%s320] %v355
                %v357 = vld [vmem:[%s327 + $0x70] sm:%s320]
                %358 = vst [vmem:[%s328 + $0x130] sm:%s320] %v357
                %v359 = vld [vmem:[%s327 + $0x78] sm:%s320]
                %360 = vst [vmem:[%s328 + $0x138] sm:%s320] %v359
              $region49: #{fwd.1} parent=43 // loop_footer
                %s326 = sadd.s32 1, %s322
              $region50: #{fwd.1} parent=43 // loop_footer_branch
                %321 = sbr.rel target = $region46
              $region51: #{fwd.1} parent=43 // loop_exit
                _
            $region44: #{fwd.1} parent=35 // pred_fallthru
              _
          $region36: #{fwd.1} parent=31 // pred_fallthru
            _
          %405 = vnop
        $region32: #{fwd.1} parent=23 // pred_fallthru
          _
      $region24: #{fwd.1} parent=5 // pred_fallthru
        _
      %p406 = scmp.le.s32.totalorder 2, %s10
      // Predicated region
      $region67: #{fwd.1} parent=5 // pred_check
        %p407 = pneg %p406
      $region68: #{fwd.1} parent=5 // pred_check_branch
        %409 = sbr.rel (%p407) target = $region70
      $region69: #{fwd.1} parent=5 // pred_region
        %s410 = ssub.s32 %s10, 2
        // Predicated region
        $region71: #{fwd.1} parent=69 // pred_check
          %p411 = pneg %p92
        $region72: #{fwd.1} parent=69 // pred_check_branch
          %413 = sbr.rel (%p411) target = $region74
        $region73: #{fwd.1} parent=69 // pred_region
          %s414 = sand.u32 %s77, 1
          %s415 = sand.u32 %s77, 1
          %s416 = smul.addr %s415, 128
          %s417 = scalar_lea.vmem [#allocation4], %s416
        $region74: #{fwd.1} parent=69 // pred_fallthru
          _
      $region70: #{fwd.1} parent=5 // pred_fallthru
        _
    $region6: #{fwd.1} parent=1 // loop_footer
      %s14 = sadd.s32 1, %s10
    $region7: #{fwd.1} parent=1 // loop_footer_branch
      %9 = sbr.rel target = $region3
    $region8: #{fwd.1} parent=1 // loop_exit
      _
    %418 = vsyncpa [#allocation3], 1
    %s419 = scalar_lea.sflag [#allocation3], 1
    %420 = vsyncpa %s419, 1

</llo_original>
